<compile_context>
chip_gen: v5e
topology: v5e:2x2
jax: 0.10.0
libtpu: 0.0.40
codegen_flags: <defaults>
</compile_context>

<pallas_src>
import functools

import jax
import jax.numpy as jnp
from jax import lax
from jax.experimental import pallas as pl
from jax.experimental.pallas import tpu as pltpu


def _round_up(x, m):
    return ((x + m - 1) // m) * m


# --------------------------------------------------------------------------
# Kernel
# --------------------------------------------------------------------------
def _fused_kernel(x_ref, t_ref, w_out_ref, b_out_ref, o_ref, *, row_offsets):
    """x_ref:[bm,n_emb] int32, t_ref:[Kpad,h1] (bias folded in),
    w_out_ref:[h1,Npad], b_out_ref:[1,Npad], o_ref:[bm,Npad]."""
    bm = x_ref.shape[0]
    k_pad = t_ref.shape[0]

    x = x_ref[...]                                            # (bm, n_emb) int32
    kcol = lax.broadcasted_iota(jnp.int32, (bm, k_pad), 1)

    # Lane-aligned one-hot: for embedder i, column (row_offsets[i] + x[b, i])
    # is 1.  Vocab blocks are disjoint and indices are in-range, so a plain OR
    # of equalities is exact (no range mask / where-carry needed).
    hits = None
    for i, off in enumerate(row_offsets):
        eq = kcol == (x[:, i:i + 1] + off)
        hits = eq if hits is None else (hits | eq)
    onehot = hits.astype(jnp.float32)                         # (bm, Kpad)

    # onehot @ T == embedding gather + fc_in + fc_hidden Linear (+ fused bias,
    # since each row of onehot has exactly n_emb ones inside the real rows).
    h = jnp.dot(onehot, t_ref[...], preferred_element_type=jnp.float32)
    h = jnp.maximum(h, 0.0)  # ReLU; Dropout(dp_rate=0) == identity
    # TODO(synk): dp_rate > 0 (training) would need pltpu.prng_seed +
    # pltpu.stateful_bernoulli here.
    o_ref[...] = (jnp.dot(h, w_out_ref[...], preferred_element_type=jnp.float32)
                  + b_out_ref[...]).astype(o_ref.dtype)


# --------------------------------------------------------------------------
# One-time parameter folding (hoisted out of the per-call path)
# --------------------------------------------------------------------------
def fold_net_embedder_params(emb_tables, w_in, b_in, w_h, b_h, w_out, b_out):
    """Pre-folds all weights; returns (arrays_dict, static_dict).

    Linear weights are stored transposed vs. PyTorch, i.e. (in_dim, out_dim).
    """
    hi = jax.lax.Precision.HIGHEST
    vocabs = tuple(int(t.shape[0]) for t in emb_tables)
    emb_dims = tuple(int(t.shape[1]) for t in emb_tables)
    n_emb = len(emb_tables)
    in_dim = sum(emb_dims)
    assert int(w_in.shape[0]) == in_dim
    h1 = int(w_h.shape[1])
    num_classes = int(w_out.shape[1])

    # Fold fc_in into fc_hidden (no activation between them).
    w01 = jnp.dot(w_in, w_h, precision=hi)                    # (in_dim, h1)
    b01 = jnp.dot(b_in, w_h, precision=hi) + b_h              # (h1,)

    # Fold the (tiny) embedding tables into that fused first layer.
    # TODO(synk): the one-hot trick only pays for small vocabularies
    # (sum(vocab)=40 here); huge tables would keep an XLA/DMA gather instead.
    t_blocks, d_off = [], 0
    for tbl, ed in zip(emb_tables, emb_dims):
        t_blocks.append(jnp.dot(tbl.astype(jnp.float32),
                                w01[d_off:d_off + ed, :], precision=hi))
        d_off += ed
    t_all = jnp.concatenate(t_blocks, axis=0)                 # (sum_vocab, h1)
    # Fold b01 into T: each one-hot row sums to exactly n_emb (one hit per
    # embedder, all inside the real rows), so adding b01/n_emb per real row
    # reproduces the bias exactly through the matmul.
    t_all = t_all + (b01 / jnp.float32(n_emb))[None, :]
    k_total = int(t_all.shape[0])
    k_pad = _round_up(k_total, 128)
    t_all = jnp.pad(t_all, ((0, k_pad - k_total), (0, 0)))

    row_offsets, off = [], 0
    for v in vocabs:
        row_offsets.append(off)
        off += v
    row_offsets = tuple(row_offsets)

    # Lane-dense output: pad num_classes up to a multiple of 128.
    n_pad = _round_up(num_classes, 128)
    w_out_p = jnp.pad(w_out, ((0, 0), (0, n_pad - num_classes)))
    b_out_p = jnp.pad(b_out, (0, n_pad - num_classes))[None, :]

    arrays = dict(t_all=t_all, w_out_p=w_out_p, b_out_p=b_out_p)
    static = dict(row_offsets=row_offsets, n_emb=n_emb, h1=h1,
                  k_pad=k_pad, n_pad=n_pad, num_classes=num_classes)
    return arrays, static


# --------------------------------------------------------------------------
# Device-aware batch tiling
# --------------------------------------------------------------------------
def _num_tensorcores():
    # v5e / v6e: 1 TensorCore per chip; v7x: 2.  Grid 'parallel' axes are
    # sharded across TCs, so only multi-TC chips benefit from >1 grid step.
    try:
        kind = jax.devices()[0].device_kind.lower()
    except Exception:  # pragma: no cover
        return 1
    return 2 if "v7" in kind else 1


def _choose_bm(b_pad8, num_tc, cap=4096):
    """Pick the batch tile. Single step on 1-TC chips when it fits; on v7x make
    the step count a positive multiple of the TC count. Per-step overhead
    (~0.35us) dominates here, so tiles are as large as VMEM comfortably allows."""
    if num_tc <= 1 or b_pad8 <= 8:
        return min(b_pad8, cap)
    steps = max(num_tc, -(-b_pad8 // cap))
    steps = -(-steps // num_tc) * num_tc          # round up to multiple of num_tc
    bm = _round_up(-(-b_pad8 // steps), 8)
    return min(bm, cap)


# --------------------------------------------------------------------------
# Forward
# --------------------------------------------------------------------------
def net_embedder_forward(x_idx, arrays, static, *, bm=None, num_tc=None):
    """x_idx: int [B, num_embedders]; returns [B, num_classes] float32."""
    t_all, w_out_p, b_out_p = arrays["t_all"], arrays["w_out_p"], arrays["b_out_p"]
    row_offsets = static["row_offsets"]
    n_emb, h1 = static["n_emb"], static["h1"]
    k_pad, n_pad, num_classes = static["k_pad"], static["n_pad"], static["num_classes"]

    B = int(x_idx.shape[0])
    b_pad8 = _round_up(max(B, 8), 8)
    if num_tc is None:
        num_tc = _num_tensorcores()
    if bm is None:
        bm = _choose_bm(b_pad8, num_tc)
    bm = max(8, _round_up(int(bm), 8))
    b_pad = _round_up(b_pad8, bm)

    x_pad = x_idx if x_idx.dtype == jnp.int32 else x_idx.astype(jnp.int32)
    if b_pad != B:
        # Padding rows reuse index 0 (valid); their outputs are sliced away.
        x_pad = jnp.pad(x_pad, ((0, b_pad - B), (0, 0)))

    kernel = functools.partial(_fused_kernel, row_offsets=row_offsets)
    full = lambda shape: pl.BlockSpec(shape, lambda i: (0, 0))

    out = pl.pallas_call(
        kernel,
        out_shape=jax.ShapeDtypeStruct((b_pad, n_pad), jnp.float32),
        grid=(b_pad // bm,),
        in_specs=[
            pl.BlockSpec((bm, n_emb), lambda i: (i, 0)),  # integer index tile
            full((k_pad, h1)),                            # fused table (gather+fc_in+fc_hidden+bias)
            full((h1, n_pad)),                            # fc_out weight (lane-padded)
            full((1, n_pad)),                             # fc_out bias   (lane-padded)
        ],
        out_specs=pl.BlockSpec((bm, n_pad), lambda i: (i, 0)),
        compiler_params=pltpu.CompilerParams(
            dimension_semantics=("parallel",)),
    )(x_pad, t_all, w_out_p, b_out_p)

    # Slice away batch padding and the lane padding of the output.
    return out[:B, :num_classes]


# --------------------------------------------------------------------------
# Pure-JAX reference (mirrors the PyTorch forward)
# --------------------------------------------------------------------------
def _reference_forward(x_idx, emb_tables, w_in, b_in, w_h, b_h, w_out, b_out):
    hi = jax.lax.Precision.HIGHEST
    feats = jnp.concatenate(
        [jnp.take(tbl, x_idx[:, i], axis=0) for i, tbl in enumerate(emb_tables)],
        axis=1,
    ).astype(jnp.float32)
    h = jnp.dot(feats, w_in, precision=hi) + b_in
    h = jnp.maximum(jnp.dot(h, w_h, precision=hi) + b_h, 0.0)
    return jnp.dot(h, w_out, precision=hi) + b_out


if __name__ == "__main__":
    # Module config: 4 embedders (vocab 10, dim 8 each) -> in_dim = 32,
    # hidden_dims = [32, 32], num_classes = 16, dp_rate = 0, additional_lookup = None.
    # TODO(synk): additional_lookup (None here) would just be another gather
    # concatenated in front of feats / folded into T the same way.
    num_embedders = 4
    vocab = 10
    emb_dim = 8
    in_dim = num_embedders * emb_dim          # 32
    hidden_dims = [32, 32]
    num_classes = 16
    B = 16

    key = jax.random.PRNGKey(0)
    keys = jax.random.split(key, 10)

    # nn.Embedding init ~ N(0, 1)
    emb_tables = tuple(
        jax.random.normal(keys[i], (vocab, emb_dim), dtype=jnp.float32)
        for i in range(num_embedders)
    )

    def linear_init(k, fan_in, fan_out):
        # nn.Linear default: U(-1/sqrt(fan_in), 1/sqrt(fan_in)); stored as (in, out).
        bound = 1.0 / jnp.sqrt(jnp.float32(fan_in))
        kw, kb = jax.random.split(k)
        w = jax.random.uniform(kw, (fan_in, fan_out), jnp.float32, -bound, bound)
        b = jax.random.uniform(kb, (fan_out,), jnp.float32, -bound, bound)
        return w, b

    w_in, b_in = linear_init(keys[4], in_dim, hidden_dims[0])
    w_h, b_h = linear_init(keys[5], hidden_dims[0], hidden_dims[1])
    w_out, b_out = linear_init(keys[6], hidden_dims[1], num_classes)

    # Integer categorical inputs: shape [B, num_embedders]
    x_idx = jax.random.randint(keys[7], (B, num_embedders), 0, vocab, dtype=jnp.int32)

    # One-time folding (hoisted out of the per-call path), then a jitted forward
    # closing over the folded constants.
    arrays, static = fold_net_embedder_params(
        emb_tables, w_in, b_in, w_h, b_h, w_out, b_out)
    arrays = jax.tree_util.tree_map(jax.block_until_ready, arrays)
    fwd = jax.jit(lambda x: net_embedder_forward(x, arrays, static))

    out = jax.block_until_ready(fwd(x_idx))

    ref = _reference_forward(x_idx, emb_tables, w_in, b_in, w_h, b_h, w_out, b_out)
    assert out.shape == (B, num_classes)
    assert jnp.allclose(out, ref, atol=1e-4, rtol=1e-4), (
        float(jnp.max(jnp.abs(out - ref))))

    print("KERNEL_OK")
</pallas_src>

<mosaic_0001>
module attributes {stable_mosaic.version = 11 : i64} {
  func.func @_fused_kernel(%arg0: i32, %arg1: memref<16x4xi32, #tpu.memory_space<vmem>>, %arg2: memref<128x32xf32, #tpu.memory_space<vmem>>, %arg3: memref<32x128xf32, #tpu.memory_space<vmem>>, %arg4: memref<1x128xf32, #tpu.memory_space<vmem>>, %arg5: memref<16x128xf32, #tpu.memory_space<vmem>>) attributes {dimension_semantics = [#tpu.dimension_semantics<parallel>], iteration_bounds = array<i64: 1>, scalar_prefetch = 0 : i64, scratch_operands = 0 : i64, tpu.core_type = #tpu.core_type<tc>, window_params = [{transform_indices = @transform_0, window_bounds = array<i64: 16, 4>}, {pipeline_mode = #tpu.pipeline_mode<synchronous>, transform_indices = @transform_1, window_bounds = array<i64: 128, 32>}, {pipeline_mode = #tpu.pipeline_mode<synchronous>, transform_indices = @transform_2, window_bounds = array<i64: 32, 128>}, {pipeline_mode = #tpu.pipeline_mode<synchronous>, transform_indices = @transform_3, window_bounds = array<i64: 1, 128>}, {transform_indices = @transform_4, window_bounds = array<i64: 16, 128>}]} {
    %c0 = arith.constant 0 : index
    %c0_0 = arith.constant 0 : index
    %0 = vector.load %arg1[%c0, %c0_0] : memref<16x4xi32, #tpu.memory_space<vmem>>, vector<16x4xi32>
    %1 = tpu.iota {dimensions = array<i32: 1>} : vector<16x128xi32>
    %2 = vector.extract_strided_slice %0 {offsets = [0, 0], sizes = [16, 1], strides = [1, 1]} : vector<16x4xi32> to vector<16x1xi32>
    %c0_i32 = arith.constant 0 : i32
    %3 = vector.broadcast %c0_i32 : i32 to vector<16x1xi32>
    %4 = arith.addi %2, %3 : vector<16x1xi32>
    %5 = vector.broadcast %4 : vector<16x1xi32> to vector<16x128xi32>
    %6 = arith.cmpi eq, %1, %5 : vector<16x128xi32>
    %7 = vector.extract_strided_slice %0 {offsets = [0, 1], sizes = [16, 1], strides = [1, 1]} : vector<16x4xi32> to vector<16x1xi32>
    %c10_i32 = arith.constant 10 : i32
    %8 = vector.broadcast %c10_i32 : i32 to vector<16x1xi32>
    %9 = arith.addi %7, %8 : vector<16x1xi32>
    %10 = vector.broadcast %9 : vector<16x1xi32> to vector<16x128xi32>
    %11 = arith.cmpi eq, %1, %10 : vector<16x128xi32>
    %12 = arith.ori %6, %11 : vector<16x128xi1>
    %13 = vector.extract_strided_slice %0 {offsets = [0, 2], sizes = [16, 1], strides = [1, 1]} : vector<16x4xi32> to vector<16x1xi32>
    %c20_i32 = arith.constant 20 : i32
    %14 = vector.broadcast %c20_i32 : i32 to vector<16x1xi32>
    %15 = arith.addi %13, %14 : vector<16x1xi32>
    %16 = vector.broadcast %15 : vector<16x1xi32> to vector<16x128xi32>
    %17 = arith.cmpi eq, %1, %16 : vector<16x128xi32>
    %18 = arith.ori %12, %17 : vector<16x128xi1>
    %19 = vector.extract_strided_slice %0 {offsets = [0, 3], sizes = [16, 1], strides = [1, 1]} : vector<16x4xi32> to vector<16x1xi32>
    %c30_i32 = arith.constant 30 : i32
    %20 = vector.broadcast %c30_i32 : i32 to vector<16x1xi32>
    %21 = arith.addi %19, %20 : vector<16x1xi32>
    %22 = vector.broadcast %21 : vector<16x1xi32> to vector<16x128xi32>
    %23 = arith.cmpi eq, %1, %22 : vector<16x128xi32>
    %24 = arith.ori %18, %23 : vector<16x128xi1>
    %25 = arith.extui %24 : vector<16x128xi1> to vector<16x128xi32>
    %26 = arith.sitofp %25 : vector<16x128xi32> to vector<16x128xf32>
    %c0_1 = arith.constant 0 : index
    %c0_2 = arith.constant 0 : index
    %27 = vector.load %arg2[%c0_1, %c0_2] : memref<128x32xf32, #tpu.memory_space<vmem>>, vector<128x32xf32>
    %cst = arith.constant dense<0.000000e+00> : vector<16x32xf32>
    %28 = tpu.matmul %26, %27, %cst {dimension_numbers = #tpu.dot_dimension_numbers<[1], [0], [0], [1], [0, 0, 1, 1], [], []>} : vector<16x128xf32>, vector<128x32xf32>, vector<16x32xf32> -> vector<16x32xf32>
    %cst_3 = arith.constant 0.000000e+00 : f32
    %29 = vector.broadcast %cst_3 : f32 to vector<16x32xf32>
    %30 = arith.maximumf %28, %29 : vector<16x32xf32>
    %c0_4 = arith.constant 0 : index
    %c0_5 = arith.constant 0 : index
    %31 = vector.load %arg3[%c0_4, %c0_5] : memref<32x128xf32, #tpu.memory_space<vmem>>, vector<32x128xf32>
    %cst_6 = arith.constant dense<0.000000e+00> : vector<16x128xf32>
    %32 = tpu.matmul %30, %31, %cst_6 {dimension_numbers = #tpu.dot_dimension_numbers<[1], [0], [0], [1], [0, 0, 1, 1], [], []>} : vector<16x32xf32>, vector<32x128xf32>, vector<16x128xf32> -> vector<16x128xf32>
    %c0_7 = arith.constant 0 : index
    %c0_8 = arith.constant 0 : index
    %33 = vector.load %arg4[%c0_7, %c0_8] : memref<1x128xf32, #tpu.memory_space<vmem>>, vector<1x128xf32>
    %34 = vector.broadcast %33 : vector<1x128xf32> to vector<16x128xf32>
    %35 = arith.addf %32, %34 : vector<16x128xf32>
    %c0_9 = arith.constant 0 : index
    %c0_10 = arith.constant 0 : index
    %36 = vector.load %arg5[%c0_9, %c0_10] : memref<16x128xf32, #tpu.memory_space<vmem>>, vector<16x128xf32>
    tpu.vector_store %arg5[%c0_9, %c0_10], %35 {strides = array<i32>} : memref<16x128xf32, #tpu.memory_space<vmem>>, vector<16x128xf32>,
    return
  }
  func.func @transform_0(%arg0: i32) -> (i32, i32) {
    %c0_i32 = arith.constant 0 : i32
    %c0_i32_0 = arith.constant 0 : i32
    return %arg0, %c0_i32 : i32, i32
  }
  func.func @transform_1(%arg0: i32) -> (i32, i32) {
    %c0_i32 = arith.constant 0 : i32
    %c0_i32_0 = arith.constant 0 : i32
    %c0_i32_1 = arith.constant 0 : i32
    return %c0_i32, %c0_i32_0 : i32, i32
  }
  func.func @transform_2(%arg0: i32) -> (i32, i32) {
    %c0_i32 = arith.constant 0 : i32
    %c0_i32_0 = arith.constant 0 : i32
    %c0_i32_1 = arith.constant 0 : i32
    return %c0_i32, %c0_i32_0 : i32, i32
  }
  func.func @transform_3(%arg0: i32) -> (i32, i32) {
    %c0_i32 = arith.constant 0 : i32
    %c0_i32_0 = arith.constant 0 : i32
    %c0_i32_1 = arith.constant 0 : i32
    return %c0_i32, %c0_i32_0 : i32, i32
  }
  func.func @transform_4(%arg0: i32) -> (i32, i32) {
    %c0_i32 = arith.constant 0 : i32
    %c0_i32_0 = arith.constant 0 : i32
    return %arg0, %c0_i32 : i32, i32
  }
}

</mosaic_0001>

<llo_original>
// kernel: _lambda_.1
$region0: #{_lambda_.1}
  #allocation0 [shape = 'u32[]', space=smem, size = 0x4, offset = 0x4, fixed_abs, tag = 'smem constant byte address 0x4 - core index']
  #allocation1 [shape = 'u32[72,128]{1,0:T(1,128)}', space=vmem, size = 0x9000, scoped, tag = 'internal scratch']
  %s0 = inlined_call_operand.vmem [shape: s32[16,4], index: 0, kind: input, shape index: {}]
  %s1 = inlined_call_operand.hbm [shape: f32[128,32], index: 1, kind: input, shape index: {}]
  %s2 = inlined_call_operand.hbm [shape: f32[32,128], index: 2, kind: input, shape index: {}]
  %s3 = inlined_call_operand.vmem [shape: f32[1,128], index: 3, kind: input, shape index: {}]
  %s4 = inlined_call_operand.hbm [shape: f32[16,128], index: 4, kind: output, shape index: {}]
  %s5 = sld [smem:[#allocation0]]
  $region34: #{_lambda_.1} parent=0
    _
  %s7 = ssub.s32 1, %s5
  %s8 = scalar_select 0, %s7, %s5
  $region1: #{_lambda_.1} parent=0
    #allocation2 [shape = 'u8[65536]{0}', space=vmem, size = 0x10000, scoped, tag = 'input window, operand 1, single buffered']
    #allocation3 [shape = 's32[1]{0}', space=sflag, size = 0x4, scoped, tag = 'scoped memory for _lambda_.1']
    #allocation4 [shape = 's32[1]{0}', space=sflag, size = 0x4, scoped, tag = 'scoped memory for _lambda_.1']
    #allocation5 [shape = 'u8[16384]{0}', space=vmem, size = 0x4000, scoped, tag = 'input window, operand 2, single buffered']
    #allocation6 [shape = 's32[1]{0}', space=sflag, size = 0x4, scoped, tag = 'scoped memory for _lambda_.1']
    #allocation7 [shape = 'u8[8192]{0}', space=vmem, size = 0x2000, scoped, tag = 'output window, operand 0, single buffered']
    %9 = vsyncpa [#allocation3], 0
    %10 = vsyncpa [#allocation6], 0
    %11 = vsyncpa [#allocation4], 0
    // Predicated region
    $region2: #{_lambda_.1} parent=1 // pred_check
      _
    $region3: #{_lambda_.1} parent=1 // pred_check_branch
      %13 = sbr.rel (0) target = $region5
    $region4: #{_lambda_.1} parent=1 // pred_region
      _
    $region5: #{_lambda_.1} parent=1 // pred_fallthru
      _
    // Predicated region
    $region6: #{_lambda_.1} parent=1 // pred_check
      _
    $region7: #{_lambda_.1} parent=1 // pred_check_branch
      %15 = sbr.rel (0) target = $region9
    $region8: #{_lambda_.1} parent=1 // pred_region
      %17 = vsyncadd [#allocation3], 0
      %s18 = sshll.u32 %s1, 4
      %s19 = int_to_ptr.hbm [resolvable:$true] %s18
      %s20 = sshll.u32 [#allocation2], 4
      %s21 = int_to_ptr.vmem [resolvable:$true] %s20
      %26 = dma.hbm_to_vmem [thread:$0]  %s19, 2048, %s21, [#allocation3], 128, 128, 8
    $region9: #{_lambda_.1} parent=1 // pred_fallthru
      _
    // Predicated region
    $region10: #{_lambda_.1} parent=1 // pred_check
      _
    $region11: #{_lambda_.1} parent=1 // pred_check_branch
      %28 = sbr.rel (0) target = $region13
    $region12: #{_lambda_.1} parent=1 // pred_region
      %30 = vsyncadd [#allocation6], 0
      %s31 = sshll.u32 %s2, 4
      %s32 = int_to_ptr.hbm [resolvable:$true] %s31
      %s33 = sshll.u32 [#allocation5], 4
      %s34 = int_to_ptr.vmem [resolvable:$true] %s33
      %39 = dma.hbm_to_vmem [thread:$0]  %s32, 512, %s34, [#allocation6], 128, 128, 8
    $region13: #{_lambda_.1} parent=1 // pred_fallthru
      _
    // Predicated region
    $region14: #{_lambda_.1} parent=1 // pred_check
      _
    $region15: #{_lambda_.1} parent=1 // pred_check_branch
      %41 = sbr.rel (0) target = $region17
    $region16: #{_lambda_.1} parent=1 // pred_region
      _
    $region17: #{_lambda_.1} parent=1 // pred_fallthru
      _
    // Predicated region
    $region18: #{_lambda_.1} parent=1 // pred_check
      _
    $region19: #{_lambda_.1} parent=1 // pred_check_branch
      %43 = sbr.rel (0) target = $region21
    $region20: #{_lambda_.1} parent=1 // pred_region
      %45 = dma.done [#allocation3], 2048
    $region21: #{_lambda_.1} parent=1 // pred_fallthru
      _
    // Predicated region
    $region22: #{_lambda_.1} parent=1 // pred_check
      _
    $region23: #{_lambda_.1} parent=1 // pred_check_branch
      %47 = sbr.rel (0) target = $region25
    $region24: #{_lambda_.1} parent=1 // pred_region
      %49 = dma.done [#allocation6], 512
    $region25: #{_lambda_.1} parent=1 // pred_fallthru
      _
    %v50 = vld [vmem:[%s0] sm:$0xff]
    %v51 = vld [vmem:[%s0 + $0x8] sm:$0xff]
    %v52 = vlaneseq
    %v53 = vand.u32 %v52, 127
    %54 = vset.pattern.permute.xlu0 0
    %55 = vperm.xlu0 %54, %v50
    %v56 = vpop.permute.xlu0 %55
    %57 = vset.pattern.permute.xlu0 0
    %58 = vperm.xlu0 %57, %v51
    %v59 = vpop.permute.xlu0 %58
    %vm60 = vcmp.eq.s32.totalorder %v53, %v56
    %vm61 = vcmp.eq.s32.totalorder %v53, %v59
    %v62 = vadd.s32 %v50, 10
    %v63 = vadd.s32 %v51, 10
    %64 = vset.pattern.permute.xlu0 1
    %65 = vperm.xlu0 %64, %v62
    %v66 = vpop.permute.xlu0 %65
    %67 = vset.pattern.permute.xlu0 1
    %68 = vperm.xlu0 %67, %v63
    %v69 = vpop.permute.xlu0 %68
    %vm70 = vcmp.eq.s32.totalorder %v53, %v66
    %vm71 = vcmp.eq.s32.totalorder %v53, %v69
    %vm72 = vmor %vm60, %vm70
    %vm73 = vmor %vm61, %vm71
    %v74 = vadd.s32 %v50, 20
    %v75 = vadd.s32 %v51, 20
    %76 = vset.pattern.permute.xlu0 2
    %77 = vperm.xlu0 %76, %v74
    %v78 = vpop.permute.xlu0 %77
    %79 = vset.pattern.permute.xlu0 2
    %80 = vperm.xlu0 %79, %v75
    %v81 = vpop.permute.xlu0 %80
    %vm82 = vcmp.eq.s32.totalorder %v53, %v78
    %vm83 = vcmp.eq.s32.totalorder %v53, %v81
    %vm84 = vmor %vm72, %vm82
    %vm85 = vmor %vm73, %vm83
    %v86 = vadd.s32 %v50, 30
    %v87 = vadd.s32 %v51, 30
    %88 = vset.pattern.permute.xlu0 3
    %89 = vperm.xlu0 %88, %v86
    %v90 = vpop.permute.xlu0 %89
    %91 = vset.pattern.permute.xlu0 3
    %92 = vperm.xlu0 %91, %v87
    %v93 = vpop.permute.xlu0 %92
    %vm94 = vcmp.eq.s32.totalorder %v53, %v90
    %vm95 = vcmp.eq.s32.totalorder %v53, %v93
    %vm96 = vmor %vm84, %vm94
    %vm97 = vmor %vm85, %vm95
    %v98 = vsel %vm96, 1, 0
    %v99 = vsel %vm97, 1, 0
    %v100 = vcvt.s32.f32 %v98
    %v101 = vcvt.s32.f32 %v99
    %v102 = vld [vmem:[#allocation2] sm:$0xff]
    %v103 = vld [vmem:[#allocation2 + $0x8] sm:$0xff]
    %v104 = vld [vmem:[#allocation2 + $0x10] sm:$0xff]
    %v105 = vld [vmem:[#allocation2 + $0x18] sm:$0xff]
    %v106 = vld [vmem:[#allocation2 + $0x20] sm:$0xff]
    %v107 = vld [vmem:[#allocation2 + $0x28] sm:$0xff]
    %v108 = vld [vmem:[#allocation2 + $0x30] sm:$0xff]
    %v109 = vld [vmem:[#allocation2 + $0x38] sm:$0xff]
    %v110 = vld [vmem:[#allocation2 + $0x40] sm:$0xff]
    %v111 = vld [vmem:[#allocation2 + $0x48] sm:$0xff]
    %v112 = vld [vmem:[#allocation2 + $0x50] sm:$0xff]
    %v113 = vld [vmem:[#allocation2 + $0x58] sm:$0xff]
    %v114 = vld [vmem:[#allocation2 + $0x60] sm:$0xff]
    %v115 = vld [vmem:[#allocation2 + $0x68] sm:$0xff]
    %v116 = vld [vmem:[#allocation2 + $0x70] sm:$0xff]
    %v117 = vld [vmem:[#allocation2 + $0x78] sm:$0xff]
    %118 = vmatpush.msra.mxu0 %v117
    %119 = vmatpush.msra.mxu0 %v116
    %120 = vmatpush.msra.mxu0 %v115
    %121 = vmatpush.msra.mxu0 %v114
    %122 = vmatpush.msra.mxu0 %v113
    %123 = vmatpush.msra.mxu0 %v112
    %124 = vmatpush.msra.mxu0 %v111
    %125 = vmatpush.msra.mxu0 %v110
    %126 = vmatpush.msra.mxu0 %v109
    %127 = vmatpush.msra.mxu0 %v108
    %128 = vmatpush.msra.mxu0 %v107
    %129 = vmatpush.msra.mxu0 %v106
    %130 = vmatpush.msra.mxu0 %v105
    %131 = vmatpush.msra.mxu0 %v104
    %132 = vmatpush.msra.mxu0 %v103
    %133 = vmatpush.msra.mxu0 %v102
    %134 = vmatmul.f32.gmra.mxu0 %v100
    %v135 = vpop.f32.mrf.mxu0
    %v136 = vadd.f32 0.0, %v135
    %137 = vmatmul.f32.gmra.mxu0 %v101
    %v138 = vpop.f32.mrf.mxu0
    %v139 = vadd.f32 0.0, %v138
    %140 = vdwg.mxu0
    %v141 = vmax.f32 %v136, 0.0
    %v142 = vmax.f32 %v139, 0.0
    %v143 = vld [vmem:[#allocation5] sm:$0xff]
    %v144 = vld [vmem:[#allocation5 + $0x8] sm:$0xff]
    %v145 = vld [vmem:[#allocation5 + $0x10] sm:$0xff]
    %v146 = vld [vmem:[#allocation5 + $0x18] sm:$0xff]
    %v147 = vld [vmem:[%s3] sm:$0x1]
    %v149 = vperm.slane %v147, 0
    %vm151 = vcmask 261120
    %v153 = vsel %vm151, %v141, 0
    %v156 = vsel %vm151, %v142, 0
    %158 = vmatpush.msra.mxu0 0.0
    %159 = vmatpush.msra.mxu0 0.0
    %160 = vmatpush.msra.mxu0 0.0
    %161 = vmatpush.msra.mxu0 0.0
    %162 = vmatpush.msra.mxu0 0.0
    %163 = vmatpush.msra.mxu0 0.0
    %164 = vmatpush.msra.mxu0 0.0
    %165 = vmatpush.msra.mxu0 0.0
    %166 = vmatpush.msra.mxu0 0.0
    %167 = vmatpush.msra.mxu0 0.0
    %168 = vmatpush.msra.mxu0 0.0
    %169 = vmatpush.msra.mxu0 0.0
    %170 = vmatpush.msra.mxu0 %v146
    %171 = vmatpush.msra.mxu0 %v145
    %172 = vmatpush.msra.mxu0 %v144
    %173 = vmatpush.msra.mxu0 %v143
    %174 = vmatmul.f32.gmra.mxu0 %v153
    %v175 = vpop.f32.mrf.mxu0
    %v176 = vadd.f32 %v149, %v175
    %177 = vmatmul.f32.gmra.mxu0 %v156
    %v178 = vpop.f32.mrf.mxu0
    %v179 = vadd.f32 %v149, %v178
    %180 = vdwg.mxu0
    %181 = vst [vmem:[#allocation7] sm:$0xff] %v176
    %182 = vst [vmem:[#allocation7 + $0x8] sm:$0xff] %v179
    // Predicated region
    $region26: #{_lambda_.1} parent=1 // pred_check
      _
    $region27: #{_lambda_.1} parent=1 // pred_check_branch
      %184 = sbr.rel (0) target = $region29
    $region28: #{_lambda_.1} parent=1 // pred_region
      %186 = vsyncadd [#allocation4], 0
      %s187 = sshll.u32 [#allocation7], 4
      %s188 = int_to_ptr.vmem [resolvable:$true] %s187
      %s189 = sshll.u32 %s4, 4
      %s190 = int_to_ptr.hbm [resolvable:$true] %s189
      %195 = dma.vmem_to_hbm [thread:$0]  %s188, 256, %s190, [#allocation4], 128, 128, 8
    $region29: #{_lambda_.1} parent=1 // pred_fallthru
      _
    // Predicated region
    $region30: #{_lambda_.1} parent=1 // pred_check
      _
    $region31: #{_lambda_.1} parent=1 // pred_check_branch
      %197 = sbr.rel (0) target = $region33
    $region32: #{_lambda_.1} parent=1 // pred_region
      %199 = dma.done [#allocation4], 256
    $region33: #{_lambda_.1} parent=1 // pred_fallthru
      _
    %200 = vsyncpa [#allocation3], 1
    %201 = vsyncpa [#allocation6], 1
    %202 = vsyncpa [#allocation4], 1

</llo_original>
